<compile_context>
chip_gen: v5e
topology: v5e:2x2
jax: 0.10.0
libtpu: 0.0.40
codegen_flags: <defaults>
</compile_context>

<pallas_src>
import jax
import jax.numpy as jnp
from jax import lax
from jax.experimental import pallas as pl
from jax.experimental.pallas import tpu as pltpu


def _round_up(x: int, m: int) -> int:
    return ((x + m - 1) // m) * m


def _critic_kernel(s_ref, a_ref, w1s_ref, w1a_ref, b1_ref, w2_ref, b2_ref,
                   w3t_ref, b3_ref, out_ref):
    # hidden layer 1: fused concat -> state @ w1_s + action @ w1_a + b1, then ReLU
    h = (jnp.dot(s_ref[...], w1s_ref[...], preferred_element_type=jnp.float32)
         + jnp.dot(a_ref[...], w1a_ref[...], preferred_element_type=jnp.float32)
         + b1_ref[...])
    h = jnp.maximum(h, 0.0)
    # hidden layer 2: Linear + ReLU
    h = jnp.dot(h, w2_ref[...], preferred_element_type=jnp.float32) + b2_ref[...]
    h = jnp.maximum(h, 0.0)
    # output head (out_dim == 1): single M=1 MXU contraction over H2 with the activation
    # tile as the (transposed) rhs -> lane-dense (1, TILE_B) row.  Avoids the explicit
    # (TILE_B, H2) XLU transpose (vector-extended slot) and keeps only one copy of h live.
    out_row = lax.dot_general(
        w3t_ref[...], h,
        dimension_numbers=(((1,), (1,)), ((), ())),
        preferred_element_type=jnp.float32)                 # (1, TILE_B)
    out_ref[...] = out_row + b3_ref[0, 0]                   # scalar bias from SMEM


def prepare_params(params, state_dim):
    """One-time parameter prep (hoist out of the per-call forward):
    split w1 into state/action halves and pre-transpose w3 to a (1, H2) row."""
    w1 = jnp.asarray(params["w1"], jnp.float32)
    return {
        "w1_s": w1[:state_dim],                                         # (S, H1)
        "w1_a": w1[state_dim:],                                         # (A, H1)
        "b1": jnp.asarray(params["b1"], jnp.float32).reshape(1, -1),    # (1, H1)
        "w2": jnp.asarray(params["w2"], jnp.float32),                   # (H1, H2)
        "b2": jnp.asarray(params["b2"], jnp.float32).reshape(1, -1),    # (1, H2)
        "w3_t": jnp.asarray(params["w3"], jnp.float32).T,               # (1, H2)
        "b3": jnp.asarray(params["b3"], jnp.float32).reshape(1, 1),     # (1, 1) -> SMEM
    }


def critic_network_forward(state, action, params, *, tile_b=None):
    """Pallas forward pass of CriticNetwork.

    state:  (B, state_dim) float32
    action: (B, action_dim) float32
    params: either raw {w1,b1,w2,b2,w3,b3} or the output of prepare_params(...)
    returns: (B,) float32   (same as torch.reshape(h, [-1]))
    """
    state = jnp.asarray(state, jnp.float32)
    action = jnp.asarray(action, jnp.float32)
    B, state_dim = state.shape
    action_dim = action.shape[-1]

    if "w1_s" not in params:   # allow raw params, but callers should prepare once
        params = prepare_params(params, state_dim)
    w1_s, w1_a = params["w1_s"], params["w1_a"]
    b1, w2, b2 = params["b1"], params["w2"], params["b2"]
    w3_t, b3 = params["w3_t"], params["b3"]
    H1, H2 = w1_s.shape[1], w2.shape[1]

    if tile_b is None:
        # Overhead/bandwidth-bound kernel: the biggest lever is fewer, larger grid steps.
        # ~ceil(B/2) keeps num_tiles >= 2 for mid/large B (both v7x TensorCores get work
        # via the "parallel" axis); capped at 2048 rows and rounded to a multiple of 128
        # so the (1, tile_b) output stays lane-dense.
        tile_b = min(2048, _round_up(pl.cdiv(max(B, 1), 2), 128))
    num_tiles = pl.cdiv(B, tile_b)

    def _const(shape):
        # Weight/bias blocks: constant index map (VMEM-resident across all grid steps),
        # single-buffered -- no second pipeline buffer for data that never changes.
        return pl.BlockSpec(shape, lambda i: (0,) * len(shape),
                            pipeline_mode=pl.Buffered(1))

    flops = 2 * B * ((state_dim + action_dim) * H1 + H1 * H2 + H2)
    bytes_accessed = 4 * (B * (state_dim + action_dim + 1)
                          + w1_s.size + w1_a.size + b1.size + w2.size + b2.size
                          + w3_t.size + b3.size)

    out = pl.pallas_call(
        _critic_kernel,
        out_shape=jax.ShapeDtypeStruct((num_tiles, 1, tile_b), jnp.float32),
        grid=(num_tiles,),
        in_specs=[
            pl.BlockSpec((tile_b, state_dim), lambda i: (i, 0)),
            pl.BlockSpec((tile_b, action_dim), lambda i: (i, 0)),
            _const((state_dim, H1)),
            _const((action_dim, H1)),
            _const((1, H1)),
            _const((H1, H2)),
            _const((1, H2)),
            _const((1, H2)),                                     # w3 pre-transposed
            pl.BlockSpec(memory_space=pltpu.MemorySpace.SMEM),   # b3 scalar
        ],
        out_specs=pl.BlockSpec((None, 1, tile_b), lambda i: (i, 0, 0)),
        compiler_params=pltpu.CompilerParams(
            dimension_semantics=("parallel",),
            # Larger batch tiles need more scoped VMEM than v5e's 16 MiB default;
            # 32 MiB is safe on all generations (v5e/v6e 128 MiB, v7x 64 MiB physical).
            vmem_limit_bytes=32 * 1024 * 1024,
        ),
        cost_estimate=pl.CostEstimate(flops=flops, transcendentals=0,
                                      bytes_accessed=bytes_accessed),
    )(state, action, w1_s, w1_a, b1, w2, b2, w3_t, b3)

    # (num_tiles, 1, tile_b) lane-dense slab -> (B,), dropping batch padding.
    # NOTE: padded rows of a ragged last tile may hold unspecified values; they are
    # dropped here and never mix with real rows.
    return out.reshape(-1)[:B]


def init_params(key, state_dim, action_dim, fc_layer_params):
    """Deterministic synthetic init (shapes match the nn.Linear layers in the module)."""
    sizes = [state_dim + action_dim] + list(fc_layer_params) + [1]
    params = {}
    names = ["1", "2", "3"]
    assert len(sizes) - 1 == len(names)
    for i, (din, dout) in enumerate(zip(sizes[:-1], sizes[1:])):
        key, kw, kb = jax.random.split(key, 3)
        bound = 1.0 / jnp.sqrt(jnp.float32(din))  # PyTorch-style uniform bound
        params[f"w{names[i]}"] = jax.random.uniform(
            kw, (din, dout), jnp.float32, minval=-bound, maxval=bound)
        params[f"b{names[i]}"] = jax.random.uniform(
            kb, (1, dout), jnp.float32, minval=-bound, maxval=bound)
    return params


def _reference_forward(state, action, params):
    h = jnp.concatenate([state, action], axis=-1)
    h = jnp.maximum(h @ params["w1"] + params["b1"], 0.0)
    h = jnp.maximum(h @ params["w2"] + params["b2"], 0.0)
    h = h @ params["w3"] + params["b3"]
    return h.reshape(-1)


if __name__ == "__main__":
    key = jax.random.PRNGKey(0)

    # Small shapes consistent with the module's forward:
    batch = 8
    state_dim = 16
    action_dim = 8
    fc_layer_params = (32, 32)

    k_params, k_state, k_action, k_state2, k_action2 = jax.random.split(key, 5)
    raw_params = init_params(k_params, state_dim, action_dim, fc_layer_params)
    params = prepare_params(raw_params, state_dim)   # one-time param prep (split/transpose)

    # Case 1: tiny batch (single ragged tile).
    state = jax.random.normal(k_state, (batch, state_dim), jnp.float32)
    action = jax.random.normal(k_action, (batch, action_dim), jnp.float32)
    out = jax.block_until_ready(critic_network_forward(state, action, params))
    ref = _reference_forward(state, action, raw_params)
    assert out.shape == (batch,), out.shape
    assert jnp.allclose(out, ref, atol=1e-4, rtol=1e-5), (out, ref)

    # Case 2: multi-tile batch with a ragged last tile (exercises the grid pipeline).
    batch2 = 300
    state2 = jax.random.normal(k_state2, (batch2, state_dim), jnp.float32)
    action2 = jax.random.normal(k_action2, (batch2, action_dim), jnp.float32)
    out2 = jax.block_until_ready(critic_network_forward(state2, action2, params))
    ref2 = _reference_forward(state2, action2, raw_params)
    assert out2.shape == (batch2,), out2.shape
    assert jnp.allclose(out2, ref2, atol=1e-4, rtol=1e-5)

    print("KERNEL_OK")
</pallas_src>

<mosaic_0001>
module attributes {stable_mosaic.version = 11 : i64} {
  func.func @_critic_kernel(%arg0: i32, %arg1: memref<128x16xf32, #tpu.memory_space<vmem>>, %arg2: memref<128x8xf32, #tpu.memory_space<vmem>>, %arg3: memref<16x32xf32, #tpu.memory_space<vmem>>, %arg4: memref<8x32xf32, #tpu.memory_space<vmem>>, %arg5: memref<1x32xf32, #tpu.memory_space<vmem>>, %arg6: memref<32x32xf32, #tpu.memory_space<vmem>>, %arg7: memref<1x32xf32, #tpu.memory_space<vmem>>, %arg8: memref<1x32xf32, #tpu.memory_space<vmem>>, %arg9: memref<1x1xf32, #tpu.memory_space<smem>>, %arg10: memref<1x1x128xf32, #tpu.memory_space<vmem>>) attributes {dimension_semantics = [#tpu.dimension_semantics<parallel>], iteration_bounds = array<i64: 1>, scalar_prefetch = 0 : i64, scratch_operands = 0 : i64, tpu.core_type = #tpu.core_type<tc>, window_params = [{transform_indices = @transform_0, window_bounds = array<i64: 128, 16>}, {transform_indices = @transform_1, window_bounds = array<i64: 128, 8>}, {pipeline_mode = #tpu.pipeline_mode<synchronous>, transform_indices = @transform_2, window_bounds = array<i64: 16, 32>}, {pipeline_mode = #tpu.pipeline_mode<synchronous>, transform_indices = @transform_3, window_bounds = array<i64: 8, 32>}, {pipeline_mode = #tpu.pipeline_mode<synchronous>, transform_indices = @transform_4, window_bounds = array<i64: 1, 32>}, {pipeline_mode = #tpu.pipeline_mode<synchronous>, transform_indices = @transform_5, window_bounds = array<i64: 32, 32>}, {pipeline_mode = #tpu.pipeline_mode<synchronous>, transform_indices = @transform_6, window_bounds = array<i64: 1, 32>}, {pipeline_mode = #tpu.pipeline_mode<synchronous>, transform_indices = @transform_7, window_bounds = array<i64: 1, 32>}, {transform_indices = @transform_8, window_bounds = array<i64: 1, 1>}, {transform_indices = @transform_9, window_bounds = array<i64: 1, 1, 128>}]} {
    %c0 = arith.constant 0 : index
    %c0_0 = arith.constant 0 : index
    %0 = vector.load %arg1[%c0, %c0_0] : memref<128x16xf32, #tpu.memory_space<vmem>>, vector<128x16xf32>
    %c0_1 = arith.constant 0 : index
    %c0_2 = arith.constant 0 : index
    %1 = vector.load %arg3[%c0_1, %c0_2] : memref<16x32xf32, #tpu.memory_space<vmem>>, vector<16x32xf32>
    %cst = arith.constant dense<0.000000e+00> : vector<128x32xf32>
    %2 = tpu.matmul %0, %1, %cst {dimension_numbers = #tpu.dot_dimension_numbers<[1], [0], [0], [1], [0, 0, 1, 1], [], []>} : vector<128x16xf32>, vector<16x32xf32>, vector<128x32xf32> -> vector<128x32xf32>
    %c0_3 = arith.constant 0 : index
    %c0_4 = arith.constant 0 : index
    %3 = vector.load %arg2[%c0_3, %c0_4] : memref<128x8xf32, #tpu.memory_space<vmem>>, vector<128x8xf32>
    %c0_5 = arith.constant 0 : index
    %c0_6 = arith.constant 0 : index
    %4 = vector.load %arg4[%c0_5, %c0_6] : memref<8x32xf32, #tpu.memory_space<vmem>>, vector<8x32xf32>
    %cst_7 = arith.constant dense<0.000000e+00> : vector<128x32xf32>
    %5 = tpu.matmul %3, %4, %cst_7 {dimension_numbers = #tpu.dot_dimension_numbers<[1], [0], [0], [1], [0, 0, 1, 1], [], []>} : vector<128x8xf32>, vector<8x32xf32>, vector<128x32xf32> -> vector<128x32xf32>
    %6 = arith.addf %2, %5 : vector<128x32xf32>
    %c0_8 = arith.constant 0 : index
    %c0_9 = arith.constant 0 : index
    %7 = vector.load %arg5[%c0_8, %c0_9] : memref<1x32xf32, #tpu.memory_space<vmem>>, vector<1x32xf32>
    %8 = vector.broadcast %7 : vector<1x32xf32> to vector<128x32xf32>
    %9 = arith.addf %6, %8 : vector<128x32xf32>
    %cst_10 = arith.constant 0.000000e+00 : f32
    %10 = vector.broadcast %cst_10 : f32 to vector<128x32xf32>
    %11 = arith.maximumf %9, %10 : vector<128x32xf32>
    %c0_11 = arith.constant 0 : index
    %c0_12 = arith.constant 0 : index
    %12 = vector.load %arg6[%c0_11, %c0_12] : memref<32x32xf32, #tpu.memory_space<vmem>>, vector<32x32xf32>
    %cst_13 = arith.constant dense<0.000000e+00> : vector<128x32xf32>
    %13 = tpu.matmul %11, %12, %cst_13 {dimension_numbers = #tpu.dot_dimension_numbers<[1], [0], [0], [1], [0, 0, 1, 1], [], []>} : vector<128x32xf32>, vector<32x32xf32>, vector<128x32xf32> -> vector<128x32xf32>
    %c0_14 = arith.constant 0 : index
    %c0_15 = arith.constant 0 : index
    %14 = vector.load %arg7[%c0_14, %c0_15] : memref<1x32xf32, #tpu.memory_space<vmem>>, vector<1x32xf32>
    %15 = vector.broadcast %14 : vector<1x32xf32> to vector<128x32xf32>
    %16 = arith.addf %13, %15 : vector<128x32xf32>
    %cst_16 = arith.constant 0.000000e+00 : f32
    %17 = vector.broadcast %cst_16 : f32 to vector<128x32xf32>
    %18 = arith.maximumf %16, %17 : vector<128x32xf32>
    %c0_17 = arith.constant 0 : index
    %c0_18 = arith.constant 0 : index
    %19 = vector.load %arg8[%c0_17, %c0_18] : memref<1x32xf32, #tpu.memory_space<vmem>>, vector<1x32xf32>
    %cst_19 = arith.constant dense<0.000000e+00> : vector<1x128xf32>
    %20 = tpu.matmul %19, %18, %cst_19 {dimension_numbers = #tpu.dot_dimension_numbers<[1], [1], [0], [0], [0, 0, 1, 0], [], []>} : vector<1x32xf32>, vector<128x32xf32>, vector<1x128xf32> -> vector<1x128xf32>
    %c0_20 = arith.constant 0 : index
    %c0_21 = arith.constant 0 : index
    %21 = memref.load %arg9[%c0_20, %c0_21] : memref<1x1xf32, #tpu.memory_space<smem>>
    %22 = vector.broadcast %21 : f32 to vector<1x128xf32>
    %23 = arith.addf %20, %22 : vector<1x128xf32>
    %c0_22 = arith.constant 0 : index
    %c0_23 = arith.constant 0 : index
    %c0_24 = arith.constant 0 : index
    %24 = vector.load %arg10[%c0_22, %c0_23, %c0_24] : memref<1x1x128xf32, #tpu.memory_space<vmem>>, vector<1x1x128xf32>
    %25 = vector.shape_cast %24 : vector<1x1x128xf32> to vector<1x128xf32>
    %26 = vector.shape_cast %23 : vector<1x128xf32> to vector<1x1x128xf32>
    tpu.vector_store %arg10[%c0_22, %c0_23, %c0_24], %26 {strides = array<i32>} : memref<1x1x128xf32, #tpu.memory_space<vmem>>, vector<1x1x128xf32>,
    return
  }
  func.func @transform_0(%arg0: i32) -> (i32, i32) {
    %c0_i32 = arith.constant 0 : i32
    %c0_i32_0 = arith.constant 0 : i32
    return %arg0, %c0_i32 : i32, i32
  }
  func.func @transform_1(%arg0: i32) -> (i32, i32) {
    %c0_i32 = arith.constant 0 : i32
    %c0_i32_0 = arith.constant 0 : i32
    return %arg0, %c0_i32 : i32, i32
  }
  func.func @transform_2(%arg0: i32) -> (i32, i32) {
    %c0_i32 = arith.constant 0 : i32
    %c0_i32_0 = arith.constant 0 : i32
    %c0_i32_1 = arith.constant 0 : i32
    return %c0_i32, %c0_i32_0 : i32, i32
  }
  func.func @transform_3(%arg0: i32) -> (i32, i32) {
    %c0_i32 = arith.constant 0 : i32
    %c0_i32_0 = arith.constant 0 : i32
    %c0_i32_1 = arith.constant 0 : i32
    return %c0_i32, %c0_i32_0 : i32, i32
  }
  func.func @transform_4(%arg0: i32) -> (i32, i32) {
    %c0_i32 = arith.constant 0 : i32
    %c0_i32_0 = arith.constant 0 : i32
    %c0_i32_1 = arith.constant 0 : i32
    return %c0_i32, %c0_i32_0 : i32, i32
  }
  func.func @transform_5(%arg0: i32) -> (i32, i32) {
    %c0_i32 = arith.constant 0 : i32
    %c0_i32_0 = arith.constant 0 : i32
    %c0_i32_1 = arith.constant 0 : i32
    return %c0_i32, %c0_i32_0 : i32, i32
  }
  func.func @transform_6(%arg0: i32) -> (i32, i32) {
    %c0_i32 = arith.constant 0 : i32
    %c0_i32_0 = arith.constant 0 : i32
    %c0_i32_1 = arith.constant 0 : i32
    return %c0_i32, %c0_i32_0 : i32, i32
  }
  func.func @transform_7(%arg0: i32) -> (i32, i32) {
    %c0_i32 = arith.constant 0 : i32
    %c0_i32_0 = arith.constant 0 : i32
    %c0_i32_1 = arith.constant 0 : i32
    return %c0_i32, %c0_i32_0 : i32, i32
  }
  func.func @transform_8(%arg0: i32) -> (i32, i32) {
    %c0_i32 = arith.constant 0 : i32
    %c0_i32_0 = arith.constant 0 : i32
    %c0_i32_1 = arith.constant 0 : i32
    return %c0_i32, %c0_i32_0 : i32, i32
  }
  func.func @transform_9(%arg0: i32) -> (i32, i32, i32) {
    %c0_i32 = arith.constant 0 : i32
    %c0_i32_0 = arith.constant 0 : i32
    %c0_i32_1 = arith.constant 0 : i32
    return %arg0, %c0_i32, %c0_i32_0 : i32, i32, i32
  }
}

</mosaic_0001>

<llo_original>
// kernel: tpu_custom_call.1
$region0: #{tpu_custom_call.1}
  #allocation0 [shape = 'u32[]', space=smem, size = 0x4, offset = 0x4, fixed_abs, tag = 'smem constant byte address 0x4 - core index']
  #allocation1 [shape = 'u32[72,128]{1,0:T(1,128)}', space=vmem, size = 0x9000, scoped, tag = 'internal scratch']
  #allocation2 [shape = 'f32[1,1]{1,0:T(1,128)S(6)}', space=smem, size = 0x200, scoped, tag = 'scoped memory for tpu_custom_call.1']
  %s0 = inlined_call_operand.hbm [shape: f32[8,16], index: 0, kind: input, shape index: {}]
  %s1 = inlined_call_operand.hbm [shape: f32[8,8], index: 1, kind: input, shape index: {}]
  %s2 = inlined_call_operand.hbm [shape: f32[16,32], index: 2, kind: input, shape index: {}]
  %s3 = inlined_call_operand.hbm [shape: f32[8,32], index: 3, kind: input, shape index: {}]
  %s4 = inlined_call_operand.vmem [shape: f32[1,32], index: 4, kind: input, shape index: {}]
  %s5 = inlined_call_operand.hbm [shape: f32[32,32], index: 5, kind: input, shape index: {}]
  %s6 = inlined_call_operand.vmem [shape: f32[1,32], index: 6, kind: input, shape index: {}]
  %s7 = inlined_call_operand.vmem [shape: f32[1,32], index: 7, kind: input, shape index: {}]
  %s8 = inlined_call_operand.<no memory space> [shape: f32[1,1], index: 8, kind: input, shape index: {}]
  %s9 = inlined_call_operand.hbm [shape: f32[1,1,128], index: 9, kind: output, shape index: {}]
  %s10 = sld [smem:[#allocation0]]
  $region66: #{tpu_custom_call.1} parent=0
    _
  %s12 = ssub.s32 1, %s10
  %s13 = scalar_select 0, %s12, %s10
  %14 = sst [smem:[#allocation2]] %s8
  $region1: #{tpu_custom_call.1} parent=0
    #allocation3 [shape = 'u8[65536]{0}', space=vmem, size = 0x10000, scoped, tag = 'input window, operand 0, single buffered']
    #allocation4 [shape = 's32[1]{0}', space=sflag, size = 0x4, scoped, tag = 'scoped memory for tpu_custom_call.1']
    #allocation5 [shape = 's32[1]{0}', space=sflag, size = 0x4, scoped, tag = 'scoped memory for tpu_custom_call.1']
    #allocation6 [shape = 'u8[65536]{0}', space=vmem, size = 0x10000, scoped, tag = 'input window, operand 1, single buffered']
    #allocation7 [shape = 's32[1]{0}', space=sflag, size = 0x4, scoped, tag = 'scoped memory for tpu_custom_call.1']
    #allocation8 [shape = 'u8[8192]{0}', space=vmem, size = 0x2000, scoped, tag = 'input window, operand 2, single buffered']
    #allocation9 [shape = 'u8[4096]{0}', space=vmem, size = 0x1000, scoped, tag = 'input window, operand 3, single buffered']
    #allocation10 [shape = 's32[1]{0}', space=sflag, size = 0x4, scoped, tag = 'scoped memory for tpu_custom_call.1']
    #allocation11 [shape = 'u8[16384]{0}', space=vmem, size = 0x4000, scoped, tag = 'input window, operand 5, single buffered']
    #allocation12 [shape = 'u8[512]{0}', space=vmem, size = 0x400, scoped, tag = 'output window, operand 0, single buffered']
    %15 = vsyncpa [#allocation4], 0
    %16 = vsyncpa [#allocation7], 0
    %17 = vsyncpa [#allocation10], 0
    %18 = vsyncpa [#allocation5], 0
    // Predicated region
    $region2: #{tpu_custom_call.1} parent=1 // pred_check
      _
    $region3: #{tpu_custom_call.1} parent=1 // pred_check_branch
      %20 = sbr.rel (0) target = $region5
    $region4: #{tpu_custom_call.1} parent=1 // pred_region
      %22 = vsyncadd [#allocation4], 1920
      %s23 = sshll.u32 %s0, 4
      %s24 = int_to_ptr.hbm [resolvable:$true] %s23
      %s25 = sshll.u32 [#allocation3], 4
      %s26 = int_to_ptr.vmem [resolvable:$true] %s25
      %31 = dma.hbm_to_vmem [thread:$0]  %s24, 128, %s26, [#allocation4], 128, 128, 8
    $region5: #{tpu_custom_call.1} parent=1 // pred_fallthru
      _
    // Predicated region
    $region6: #{tpu_custom_call.1} parent=1 // pred_check
      _
    $region7: #{tpu_custom_call.1} parent=1 // pred_check_branch
      %33 = sbr.rel (0) target = $region9
    $region8: #{tpu_custom_call.1} parent=1 // pred_region
      %35 = vsyncadd [#allocation7], 1920
      %s36 = sshll.u32 %s1, 4
      %s37 = int_to_ptr.hbm [resolvable:$true] %s36
      %s38 = sshll.u32 [#allocation6], 4
      %s39 = int_to_ptr.vmem [resolvable:$true] %s38
      %44 = dma.hbm_to_vmem [thread:$0]  %s37, 128, %s39, [#allocation7], 128, 128, 8
    $region9: #{tpu_custom_call.1} parent=1 // pred_fallthru
      _
    // Predicated region
    $region10: #{tpu_custom_call.1} parent=1 // pred_check
      _
    $region11: #{tpu_custom_call.1} parent=1 // pred_check_branch
      %46 = sbr.rel (0) target = $region13
    $region12: #{tpu_custom_call.1} parent=1 // pred_region
      %48 = vsyncadd [#allocation7], 0
      %s49 = sshll.u32 %s2, 4
      %s50 = int_to_ptr.hbm [resolvable:$true] %s49
      %s51 = sshll.u32 [#allocation8], 4
      %s52 = int_to_ptr.vmem [resolvable:$true] %s51
      %57 = dma.hbm_to_vmem [thread:$0]  %s50, 256, %s52, [#allocation7], 128, 128, 8
    $region13: #{tpu_custom_call.1} parent=1 // pred_fallthru
      _
    // Predicated region
    $region14: #{tpu_custom_call.1} parent=1 // pred_check
      _
    $region15: #{tpu_custom_call.1} parent=1 // pred_check_branch
      %59 = sbr.rel (0) target = $region17
    $region16: #{tpu_custom_call.1} parent=1 // pred_region
      %61 = vsyncadd [#allocation10], 0
      %s63 = sshll.u32 %s3, 4
      %s64 = int_to_ptr.hbm [resolvable:$true] %s63
      %s65 = sshll.u32 [#allocation9], 4
      %s66 = int_to_ptr.vmem [resolvable:$true] %s65
      %68 = dma.hbm_to_vmem [thread:$0]  %s64, 128, %s66, [#allocation10]
    $region17: #{tpu_custom_call.1} parent=1 // pred_fallthru
      _
    // Predicated region
    $region18: #{tpu_custom_call.1} parent=1 // pred_check
      _
    $region19: #{tpu_custom_call.1} parent=1 // pred_check_branch
      %70 = sbr.rel (0) target = $region21
    $region20: #{tpu_custom_call.1} parent=1 // pred_region
      _
    $region21: #{tpu_custom_call.1} parent=1 // pred_fallthru
      _
    // Predicated region
    $region22: #{tpu_custom_call.1} parent=1 // pred_check
      _
    $region23: #{tpu_custom_call.1} parent=1 // pred_check_branch
      %72 = sbr.rel (0) target = $region25
    $region24: #{tpu_custom_call.1} parent=1 // pred_region
      %74 = vsyncadd [#allocation10], 0
      %s75 = sshll.u32 %s5, 4
      %s76 = int_to_ptr.hbm [resolvable:$true] %s75
      %s77 = sshll.u32 [#allocation11], 4
      %s78 = int_to_ptr.vmem [resolvable:$true] %s77
      %83 = dma.hbm_to_vmem [thread:$0]  %s76, 512, %s78, [#allocation10], 128, 128, 8
    $region25: #{tpu_custom_call.1} parent=1 // pred_fallthru
      _
    // Predicated region
    $region26: #{tpu_custom_call.1} parent=1 // pred_check
      _
    $region27: #{tpu_custom_call.1} parent=1 // pred_check_branch
      %85 = sbr.rel (0) target = $region29
    $region28: #{tpu_custom_call.1} parent=1 // pred_region
      _
    $region29: #{tpu_custom_call.1} parent=1 // pred_fallthru
      _
    // Predicated region
    $region30: #{tpu_custom_call.1} parent=1 // pred_check
      _
    $region31: #{tpu_custom_call.1} parent=1 // pred_check_branch
      %87 = sbr.rel (0) target = $region33
    $region32: #{tpu_custom_call.1} parent=1 // pred_region
      _
    $region33: #{tpu_custom_call.1} parent=1 // pred_fallthru
      _
    // Predicated region
    $region34: #{tpu_custom_call.1} parent=1 // pred_check
      _
    $region35: #{tpu_custom_call.1} parent=1 // pred_check_branch
      %89 = sbr.rel (0) target = $region37
    $region36: #{tpu_custom_call.1} parent=1 // pred_region
      _
    $region37: #{tpu_custom_call.1} parent=1 // pred_fallthru
      _
    // Predicated region
    $region38: #{tpu_custom_call.1} parent=1 // pred_check
      _
    $region39: #{tpu_custom_call.1} parent=1 // pred_check_branch
      %91 = sbr.rel (0) target = $region41
    $region40: #{tpu_custom_call.1} parent=1 // pred_region
      %93 = dma.done [#allocation4], 2048
    $region41: #{tpu_custom_call.1} parent=1 // pred_fallthru
      _
    // Predicated region
    $region42: #{tpu_custom_call.1} parent=1 // pred_check
      _
    $region43: #{tpu_custom_call.1} parent=1 // pred_check_branch
      %95 = sbr.rel (0) target = $region45
    $region44: #{tpu_custom_call.1} parent=1 // pred_region
      %97 = dma.done [#allocation7], 2048
    $region45: #{tpu_custom_call.1} parent=1 // pred_fallthru
      _
    // Predicated region
    $region46: #{tpu_custom_call.1} parent=1 // pred_check
      _
    $region47: #{tpu_custom_call.1} parent=1 // pred_check_branch
      %99 = sbr.rel (0) target = $region49
    $region48: #{tpu_custom_call.1} parent=1 // pred_region
      %101 = dma.done [#allocation7], 256
    $region49: #{tpu_custom_call.1} parent=1 // pred_fallthru
      _
    // Predicated region
    $region50: #{tpu_custom_call.1} parent=1 // pred_check
      _
    $region51: #{tpu_custom_call.1} parent=1 // pred_check_branch
      %103 = sbr.rel (0) target = $region53
    $region52: #{tpu_custom_call.1} parent=1 // pred_region
      %105 = dma.done [#allocation10], 128
    $region53: #{tpu_custom_call.1} parent=1 // pred_fallthru
      _
    // Predicated region
    $region54: #{tpu_custom_call.1} parent=1 // pred_check
      _
    $region55: #{tpu_custom_call.1} parent=1 // pred_check_branch
      %107 = sbr.rel (0) target = $region57
    $region56: #{tpu_custom_call.1} parent=1 // pred_region
      %109 = dma.done [#allocation10], 512
    $region57: #{tpu_custom_call.1} parent=1 // pred_fallthru
      _
    %v110 = vld [vmem:[#allocation3] sm:$0xff]
    %v111 = vld [vmem:[#allocation3 + $0x8] sm:$0xff]
    %v112 = vld [vmem:[#allocation3 + $0x10] sm:$0xff]
    %v113 = vld [vmem:[#allocation3 + $0x18] sm:$0xff]
    %v114 = vld [vmem:[#allocation3 + $0x20] sm:$0xff]
    %v115 = vld [vmem:[#allocation3 + $0x28] sm:$0xff]
    %v116 = vld [vmem:[#allocation3 + $0x30] sm:$0xff]
    %v117 = vld [vmem:[#allocation3 + $0x38] sm:$0xff]
    %v118 = vld [vmem:[#allocation3 + $0x40] sm:$0xff]
    %v119 = vld [vmem:[#allocation3 + $0x48] sm:$0xff]
    %v120 = vld [vmem:[#allocation3 + $0x50] sm:$0xff]
    %v121 = vld [vmem:[#allocation3 + $0x58] sm:$0xff]
    %v122 = vld [vmem:[#allocation3 + $0x60] sm:$0xff]
    %v123 = vld [vmem:[#allocation3 + $0x68] sm:$0xff]
    %v124 = vld [vmem:[#allocation3 + $0x70] sm:$0xff]
    %v125 = vld [vmem:[#allocation3 + $0x78] sm:$0xff]
    %v126 = vld [vmem:[#allocation8] sm:$0xff]
    %v127 = vld [vmem:[#allocation8 + $0x8] sm:$0xff]
    %v128 = vld [vmem:[#allocation6] sm:$0xff]
    %v129 = vld [vmem:[#allocation6 + $0x8] sm:$0xff]
    %v130 = vld [vmem:[#allocation6 + $0x10] sm:$0xff]
    %v131 = vld [vmem:[#allocation6 + $0x18] sm:$0xff]
    %v132 = vld [vmem:[#allocation6 + $0x20] sm:$0xff]
    %v133 = vld [vmem:[#allocation6 + $0x28] sm:$0xff]
    %v134 = vld [vmem:[#allocation6 + $0x30] sm:$0xff]
    %v135 = vld [vmem:[#allocation6 + $0x38] sm:$0xff]
    %v136 = vld [vmem:[#allocation6 + $0x40] sm:$0xff]
    %v137 = vld [vmem:[#allocation6 + $0x48] sm:$0xff]
    %v138 = vld [vmem:[#allocation6 + $0x50] sm:$0xff]
    %v139 = vld [vmem:[#allocation6 + $0x58] sm:$0xff]
    %v140 = vld [vmem:[#allocation6 + $0x60] sm:$0xff]
    %v141 = vld [vmem:[#allocation6 + $0x68] sm:$0xff]
    %v142 = vld [vmem:[#allocation6 + $0x70] sm:$0xff]
    %v143 = vld [vmem:[#allocation6 + $0x78] sm:$0xff]
    %v144 = vld [vmem:[#allocation9] sm:$0xff]
    %vm145 = vcmask 64512
    %v147 = vsel %vm145, %v128, 0
    %v150 = vsel %vm145, %v129, 0
    %v153 = vsel %vm145, %v130, 0
    %v156 = vsel %vm145, %v131, 0
    %v159 = vsel %vm145, %v132, 0
    %v162 = vsel %vm145, %v133, 0
    %v165 = vsel %vm145, %v134, 0
    %v168 = vsel %vm145, %v135, 0
    %v171 = vsel %vm145, %v136, 0
    %v174 = vsel %vm145, %v137, 0
    %v177 = vsel %vm145, %v138, 0
    %v180 = vsel %vm145, %v139, 0
    %v183 = vsel %vm145, %v140, 0
    %v186 = vsel %vm145, %v141, 0
    %v189 = vsel %vm145, %v142, 0
    %v192 = vsel %vm145, %v143, 0
    %194 = vmatpush.msra.mxu0 0.0
    %195 = vmatpush.msra.mxu0 0.0
    %196 = vmatpush.msra.mxu0 0.0
    %197 = vmatpush.msra.mxu0 0.0
    %198 = vmatpush.msra.mxu0 0.0
    %199 = vmatpush.msra.mxu0 0.0
    %200 = vmatpush.msra.mxu0 0.0
    %201 = vmatpush.msra.mxu0 0.0
    %202 = vmatpush.msra.mxu0 0.0
    %203 = vmatpush.msra.mxu0 0.0
    %204 = vmatpush.msra.mxu0 0.0
    %205 = vmatpush.msra.mxu0 0.0
    %206 = vmatpush.msra.mxu0 0.0
    %207 = vmatpush.msra.mxu0 0.0
    %208 = vmatpush.msra.mxu0 0.0
    %209 = vmatpush.msra.mxu0 %v144
    %210 = vmatmul.f32.gmra.mxu0 %v147
    %v211 = vpop.f32.mrf.mxu0
    %v212 = vadd.f32 0.0, %v211
    %213 = vmatmul.f32.gmra.mxu0 %v150
    %v214 = vpop.f32.mrf.mxu0
    %v215 = vadd.f32 0.0, %v214
    %216 = vmatmul.f32.gmra.mxu0 %v153
    %v217 = vpop.f32.mrf.mxu0
    %v218 = vadd.f32 0.0, %v217
    %219 = vmatmul.f32.gmra.mxu0 %v156
    %v220 = vpop.f32.mrf.mxu0
    %v221 = vadd.f32 0.0, %v220
    %222 = vmatmul.f32.gmra.mxu0 %v159
    %v223 = vpop.f32.mrf.mxu0
    %v224 = vadd.f32 0.0, %v223
    %225 = vmatmul.f32.gmra.mxu0 %v162
    %v226 = vpop.f32.mrf.mxu0
    %v227 = vadd.f32 0.0, %v226
    %228 = vmatmul.f32.gmra.mxu0 %v165
    %v229 = vpop.f32.mrf.mxu0
    %v230 = vadd.f32 0.0, %v229
    %231 = vmatmul.f32.gmra.mxu0 %v168
    %v232 = vpop.f32.mrf.mxu0
    %v233 = vadd.f32 0.0, %v232
    %234 = vmatmul.f32.gmra.mxu0 %v171
    %v235 = vpop.f32.mrf.mxu0
    %v236 = vadd.f32 0.0, %v235
    %237 = vmatmul.f32.gmra.mxu0 %v174
    %v238 = vpop.f32.mrf.mxu0
    %v239 = vadd.f32 0.0, %v238
    %240 = vmatmul.f32.gmra.mxu0 %v177
    %v241 = vpop.f32.mrf.mxu0
    %v242 = vadd.f32 0.0, %v241
    %243 = vmatmul.f32.gmra.mxu0 %v180
    %v244 = vpop.f32.mrf.mxu0
    %v245 = vadd.f32 0.0, %v244
    %246 = vmatmul.f32.gmra.mxu0 %v183
    %v247 = vpop.f32.mrf.mxu0
    %v248 = vadd.f32 0.0, %v247
    %249 = vmatmul.f32.gmra.mxu0 %v186
    %v250 = vpop.f32.mrf.mxu0
    %v251 = vadd.f32 0.0, %v250
    %252 = vmatmul.f32.gmra.mxu0 %v189
    %v253 = vpop.f32.mrf.mxu0
    %v254 = vadd.f32 0.0, %v253
    %255 = vmatmul.f32.gmra.mxu0 %v192
    %v256 = vpop.f32.mrf.mxu0
    %v257 = vadd.f32 0.0, %v256
    %258 = vdwg.mxu0
    %vm259 = vcmask 130048
    %v261 = vsel %vm259, %v110, 0
    %v264 = vsel %vm259, %v111, 0
    %v267 = vsel %vm259, %v112, 0
    %v270 = vsel %vm259, %v113, 0
    %v273 = vsel %vm259, %v114, 0
    %v276 = vsel %vm259, %v115, 0
    %v279 = vsel %vm259, %v116, 0
    %v282 = vsel %vm259, %v117, 0
    %v285 = vsel %vm259, %v118, 0
    %v288 = vsel %vm259, %v119, 0
    %v291 = vsel %vm259, %v120, 0
    %v294 = vsel %vm259, %v121, 0
    %v297 = vsel %vm259, %v122, 0
    %v300 = vsel %vm259, %v123, 0
    %v303 = vsel %vm259, %v124, 0
    %v306 = vsel %vm259, %v125, 0
    %308 = vmatpush.msra.mxu0 0.0
    %309 = vmatpush.msra.mxu0 0.0
    %310 = vmatpush.msra.mxu0 0.0
    %311 = vmatpush.msra.mxu0 0.0
    %312 = vmatpush.msra.mxu0 0.0
    %313 = vmatpush.msra.mxu0 0.0
    %314 = vmatpush.msra.mxu0 0.0
    %315 = vmatpush.msra.mxu0 0.0
    %316 = vmatpush.msra.mxu0 0.0
    %317 = vmatpush.msra.mxu0 0.0
    %318 = vmatpush.msra.mxu0 0.0
    %319 = vmatpush.msra.mxu0 0.0
    %320 = vmatpush.msra.mxu0 0.0
    %321 = vmatpush.msra.mxu0 0.0
    %322 = vmatpush.msra.mxu0 %v127
    %323 = vmatpush.msra.mxu0 %v126
    %324 = vmatmul.f32.gmra.mxu0 %v261
    %v325 = vpop.f32.mrf.mxu0
    %v326 = vadd.f32 %v212, %v325
    %327 = vmatmul.f32.gmra.mxu0 %v264
    %v328 = vpop.f32.mrf.mxu0
    %v329 = vadd.f32 %v215, %v328
    %330 = vmatmul.f32.gmra.mxu0 %v267
    %v331 = vpop.f32.mrf.mxu0
    %v332 = vadd.f32 %v218, %v331
    %333 = vmatmul.f32.gmra.mxu0 %v270
    %v334 = vpop.f32.mrf.mxu0
    %v335 = vadd.f32 %v221, %v334
    %336 = vmatmul.f32.gmra.mxu0 %v273
    %v337 = vpop.f32.mrf.mxu0
    %v338 = vadd.f32 %v224, %v337
    %339 = vmatmul.f32.gmra.mxu0 %v276
    %v340 = vpop.f32.mrf.mxu0
    %v341 = vadd.f32 %v227, %v340
    %342 = vmatmul.f32.gmra.mxu0 %v279
    %v343 = vpop.f32.mrf.mxu0
    %v344 = vadd.f32 %v230, %v343
    %345 = vmatmul.f32.gmra.mxu0 %v282
    %v346 = vpop.f32.mrf.mxu0
    %v347 = vadd.f32 %v233, %v346
    %348 = vmatmul.f32.gmra.mxu0 %v285
    %v349 = vpop.f32.mrf.mxu0
    %v350 = vadd.f32 %v236, %v349
    %351 = vmatmul.f32.gmra.mxu0 %v288
    %v352 = vpop.f32.mrf.mxu0
    %v353 = vadd.f32 %v239, %v352
    %354 = vmatmul.f32.gmra.mxu0 %v291
    %v355 = vpop.f32.mrf.mxu0
    %v356 = vadd.f32 %v242, %v355
    %357 = vmatmul.f32.gmra.mxu0 %v294
    %v358 = vpop.f32.mrf.mxu0
    %v359 = vadd.f32 %v245, %v358
    %360 = vmatmul.f32.gmra.mxu0 %v297
    %v361 = vpop.f32.mrf.mxu0
    %v362 = vadd.f32 %v248, %v361
    %363 = vmatmul.f32.gmra.mxu0 %v300
    %v364 = vpop.f32.mrf.mxu0
    %v365 = vadd.f32 %v251, %v364
    %366 = vmatmul.f32.gmra.mxu0 %v303
    %v367 = vpop.f32.mrf.mxu0
    %v368 = vadd.f32 %v254, %v367
    %369 = vmatmul.f32.gmra.mxu0 %v306
    %v370 = vpop.f32.mrf.mxu0
    %v371 = vadd.f32 %v257, %v370
    %372 = vdwg.mxu0
    %v373 = vld [vmem:[%s4] sm:$0x1]
    %v375 = vperm.slane %v373, 0
    %v377 = vadd.f32 %v326, %v375
    %v378 = vadd.f32 %v329, %v375
    %v379 = vadd.f32 %v332, %v375
    %v380 = vadd.f32 %v335, %v375
    %v381 = vadd.f32 %v338, %v375
    %v382 = vadd.f32 %v341, %v375
    %v383 = vadd.f32 %v344, %v375
    %v384 = vadd.f32 %v347, %v375
    %v385 = vadd.f32 %v350, %v375
    %v386 = vadd.f32 %v353, %v375
    %v387 = vadd.f32 %v356, %v375
    %v388 = vadd.f32 %v359, %v375
    %v389 = vadd.f32 %v362, %v375
    %v390 = vadd.f32 %v365, %v375
    %v391 = vadd.f32 %v368, %v375
    %v392 = vadd.f32 %v371, %v375
    %v393 = vmax.f32 %v377, 0.0
    %v394 = vmax.f32 %v378, 0.0
    %v395 = vmax.f32 %v379, 0.0
    %v396 = vmax.f32 %v380, 0.0
    %v397 = vmax.f32 %v381, 0.0
    %v398 = vmax.f32 %v382, 0.0
    %v399 = vmax.f32 %v383, 0.0
    %v400 = vmax.f32 %v384, 0.0
    %v401 = vmax.f32 %v385, 0.0
    %v402 = vmax.f32 %v386, 0.0
    %v403 = vmax.f32 %v387, 0.0
    %v404 = vmax.f32 %v388, 0.0
    %v405 = vmax.f32 %v389, 0.0
    %v406 = vmax.f32 %v390, 0.0
    %v407 = vmax.f32 %v391, 0.0
    %v408 = vmax.f32 %v392, 0.0
    %v409 = vld [vmem:[#allocation11] sm:$0xff]
    %v410 = vld [vmem:[#allocation11 + $0x8] sm:$0xff]
    %v411 = vld [vmem:[#allocation11 + $0x10] sm:$0xff]
    %v412 = vld [vmem:[#allocation11 + $0x18] sm:$0xff]
    %v413 = vld [vmem:[%s6] sm:$0x1]
    %v415 = vperm.slane %v413, 0
    %vm417 = vcmask 261120
    %v419 = vsel %vm417, %v393, 0
    %v422 = vsel %vm417, %v394, 0
    %v425 = vsel %vm417, %v395, 0
    %v428 = vsel %vm417, %v396, 0
    %v431 = vsel %vm417, %v397, 0
    %v434 = vsel %vm417, %v398, 0
    %v437 = vsel %vm417, %v399, 0
    %v440 = vsel %vm417, %v400, 0
    %v443 = vsel %vm417, %v401, 0
    %v446 = vsel %vm417, %v402, 0
    %v449 = vsel %vm417, %v403, 0
    %v452 = vsel %vm417, %v404, 0
    %v455 = vsel %vm417, %v405, 0
    %v458 = vsel %vm417, %v406, 0
    %v461 = vsel %vm417, %v407, 0
    %v464 = vsel %vm417, %v408, 0
    %466 = vmatpush.msra.mxu0 0.0
    %467 = vmatpush.msra.mxu0 0.0
    %468 = vmatpush.msra.mxu0 0.0
    %469 = vmatpush.msra.mxu0 0.0
    %470 = vmatpush.msra.mxu0 0.0
    %471 = vmatpush.msra.mxu0 0.0
    %472 = vmatpush.msra.mxu0 0.0
    %473 = vmatpush.msra.mxu0 0.0
    %474 = vmatpush.msra.mxu0 0.0
    %475 = vmatpush.msra.mxu0 0.0
    %476 = vmatpush.msra.mxu0 0.0
    %477 = vmatpush.msra.mxu0 0.0
    %478 = vmatpush.msra.mxu0 %v412
    %479 = vmatpush.msra.mxu0 %v411
    %480 = vmatpush.msra.mxu0 %v410
    %481 = vmatpush.msra.mxu0 %v409
    %482 = vmatmul.f32.gmra.mxu0 %v419
    %v483 = vpop.f32.mrf.mxu0
    %v484 = vadd.f32 %v415, %v483
    %485 = vmatmul.f32.gmra.mxu0 %v422
    %v486 = vpop.f32.mrf.mxu0
    %v487 = vadd.f32 %v415, %v486
    %488 = vmatmul.f32.gmra.mxu0 %v425
    %v489 = vpop.f32.mrf.mxu0
    %v490 = vadd.f32 %v415, %v489
    %491 = vmatmul.f32.gmra.mxu0 %v428
    %v492 = vpop.f32.mrf.mxu0
    %v493 = vadd.f32 %v415, %v492
    %494 = vmatmul.f32.gmra.mxu0 %v431
    %v495 = vpop.f32.mrf.mxu0
    %v496 = vadd.f32 %v415, %v495
    %497 = vmatmul.f32.gmra.mxu0 %v434
    %v498 = vpop.f32.mrf.mxu0
    %v499 = vadd.f32 %v415, %v498
    %500 = vmatmul.f32.gmra.mxu0 %v437
    %v501 = vpop.f32.mrf.mxu0
    %v502 = vadd.f32 %v415, %v501
    %503 = vmatmul.f32.gmra.mxu0 %v440
    %v504 = vpop.f32.mrf.mxu0
    %v505 = vadd.f32 %v415, %v504
    %506 = vmatmul.f32.gmra.mxu0 %v443
    %v507 = vpop.f32.mrf.mxu0
    %v508 = vadd.f32 %v415, %v507
    %509 = vmatmul.f32.gmra.mxu0 %v446
    %v510 = vpop.f32.mrf.mxu0
    %v511 = vadd.f32 %v415, %v510
    %512 = vmatmul.f32.gmra.mxu0 %v449
    %v513 = vpop.f32.mrf.mxu0
    %v514 = vadd.f32 %v415, %v513
    %515 = vmatmul.f32.gmra.mxu0 %v452
    %v516 = vpop.f32.mrf.mxu0
    %v517 = vadd.f32 %v415, %v516
    %518 = vmatmul.f32.gmra.mxu0 %v455
    %v519 = vpop.f32.mrf.mxu0
    %v520 = vadd.f32 %v415, %v519
    %521 = vmatmul.f32.gmra.mxu0 %v458
    %v522 = vpop.f32.mrf.mxu0
    %v523 = vadd.f32 %v415, %v522
    %524 = vmatmul.f32.gmra.mxu0 %v461
    %v525 = vpop.f32.mrf.mxu0
    %v526 = vadd.f32 %v415, %v525
    %527 = vmatmul.f32.gmra.mxu0 %v464
    %v528 = vpop.f32.mrf.mxu0
    %v529 = vadd.f32 %v415, %v528
    %530 = vdwg.mxu0
    %v531 = vmax.f32 %v484, 0.0
    %v532 = vmax.f32 %v487, 0.0
    %v533 = vmax.f32 %v490, 0.0
    %v534 = vmax.f32 %v493, 0.0
    %v535 = vmax.f32 %v496, 0.0
    %v536 = vmax.f32 %v499, 0.0
    %v537 = vmax.f32 %v502, 0.0
    %v538 = vmax.f32 %v505, 0.0
    %v539 = vmax.f32 %v508, 0.0
    %v540 = vmax.f32 %v511, 0.0
    %v541 = vmax.f32 %v514, 0.0
    %v542 = vmax.f32 %v517, 0.0
    %v543 = vmax.f32 %v520, 0.0
    %v544 = vmax.f32 %v523, 0.0
    %v545 = vmax.f32 %v526, 0.0
    %v546 = vmax.f32 %v529, 0.0
    %v547 = vld [vmem:[%s7] sm:$0x1]
    %s548 = sld [smem:[#allocation2]]
    %v549 = vstv %s548
    %v551 = vsel %vm417, %v547, 0
    %v554 = vsel %vm417, %v531, 0
    %v557 = vsel %vm417, %v532, 0
    %v560 = vsel %vm417, %v533, 0
    %v563 = vsel %vm417, %v534, 0
    %v566 = vsel %vm417, %v535, 0
    %v569 = vsel %vm417, %v536, 0
    %v572 = vsel %vm417, %v537, 0
    %v575 = vsel %vm417, %v538, 0
    %v578 = vsel %vm417, %v539, 0
    %v581 = vsel %vm417, %v540, 0
    %v584 = vsel %vm417, %v541, 0
    %v587 = vsel %vm417, %v542, 0
    %v590 = vsel %vm417, %v543, 0
    %v593 = vsel %vm417, %v544, 0
    %v596 = vsel %vm417, %v545, 0
    %v599 = vsel %vm417, %v546, 0
    %601 = vmatpush.xpose.msra.mxu0 %v599
    %602 = vmatpush.xpose.msra.mxu0 %v596
    %603 = vmatpush.xpose.msra.mxu0 %v593
    %604 = vmatpush.xpose.msra.mxu0 %v590
    %605 = vmatpush.xpose.msra.mxu0 %v587
    %606 = vmatpush.xpose.msra.mxu0 %v584
    %607 = vmatpush.xpose.msra.mxu0 %v581
    %608 = vmatpush.xpose.msra.mxu0 %v578
    %609 = vmatpush.xpose.msra.mxu0 %v575
    %610 = vmatpush.xpose.msra.mxu0 %v572
    %611 = vmatpush.xpose.msra.mxu0 %v569
    %612 = vmatpush.xpose.msra.mxu0 %v566
    %613 = vmatpush.xpose.msra.mxu0 %v563
    %614 = vmatpush.xpose.msra.mxu0 %v560
    %615 = vmatpush.xpose.msra.mxu0 %v557
    %616 = vmatpush.xpose.msra.mxu0 %v554
    %617 = vmatmul.f32.gmra.mxu0 %v551
    %v618 = vpop.f32.mrf.mxu0
    %v619 = vadd.f32 %v549, %v618
    %620 = vdwg.mxu0
    %621 = vst [vmem:[#allocation12] sm:$0x1] %v619
    // Predicated region
    $region58: #{tpu_custom_call.1} parent=1 // pred_check
      _
    $region59: #{tpu_custom_call.1} parent=1 // pred_check_branch
      %623 = sbr.rel (0) target = $region61
    $region60: #{tpu_custom_call.1} parent=1 // pred_region
      %625 = vsyncadd [#allocation5], 0
      %s627 = sshll.u32 [#allocation12], 4
      %s628 = int_to_ptr.vmem [resolvable:$true] %s627
      %s629 = sshll.u32 %s9, 4
      %s630 = int_to_ptr.hbm [resolvable:$true] %s629
      %632 = dma.vmem_to_hbm [thread:$0]  %s628, 16, %s630, [#allocation5]
    $region61: #{tpu_custom_call.1} parent=1 // pred_fallthru
      _
    // Predicated region
    $region62: #{tpu_custom_call.1} parent=1 // pred_check
      _
    $region63: #{tpu_custom_call.1} parent=1 // pred_check_branch
      %634 = sbr.rel (0) target = $region65
    $region64: #{tpu_custom_call.1} parent=1 // pred_region
      %636 = dma.done [#allocation5], 16
    $region65: #{tpu_custom_call.1} parent=1 // pred_fallthru
      _
    %637 = vsyncpa [#allocation4], 1
    %638 = vsyncpa [#allocation7], 1
    %639 = vsyncpa [#allocation10], 1
    %640 = vsyncpa [#allocation5], 1

</llo_original>
